<compile_context>
chip_gen: v5e
topology: v5e:2x2
jax: 0.10.0
libtpu: 0.0.40
codegen_flags: <defaults>
</compile_context>

<pallas_src>
import jax
import jax.numpy as jnp
from jax.experimental import pallas as pl
from jax.experimental.pallas import tpu as pltpu

_LANE = 128
_ROW = 16  # sublane multiple; 16 keeps bf16-packed vregs clean on all gens


def _round_up(n, m):
    return ((n + m - 1) // m) * m


def _batch_tiles(B, block_b):
    """Pick (tile_rows, padded_rows, num_tiles) for the batch grid axis."""
    b_min = _round_up(max(B, 1), _ROW)
    tb = min(_round_up(block_b, _ROW), b_min)
    # Keep at least 2 grid steps when the batch allows it so both v7x
    # TensorCores receive work; v5e/v6e (1 TC) are unaffected.
    if tb >= b_min and b_min >= 2 * _ROW:
        tb = _round_up(pl.cdiv(b_min, 2), _ROW)
    b_p = _round_up(b_min, tb)
    return tb, b_p, b_p // tb


def _policy_kernel(x_ref, w1_ref, b1_ref, w2_ref, b2_ref, w3_ref, b3_ref, o_ref):
    # Cast x to the weight dtype (bf16) in-kernel; accumulate in f32.
    x = x_ref[...].astype(w1_ref.dtype)
    # Linear(input, hidden) + ReLU
    h1 = jnp.dot(x, w1_ref[...], preferred_element_type=jnp.float32) + b1_ref[...]
    h1 = jnp.maximum(h1, 0.0)
    # Linear(hidden, hidden) + ReLU
    h2 = jnp.dot(h1.astype(w2_ref.dtype), w2_ref[...],
                 preferred_element_type=jnp.float32) + b2_ref[...]
    h2 = jnp.maximum(h2, 0.0)
    # Linear(hidden, output)
    logits = jnp.dot(h2.astype(w3_ref.dtype), w3_ref[...],
                     preferred_element_type=jnp.float32) + b3_ref[...]
    # softmax over dim=1 (last axis), numerically stable, f32, exact divide
    m = jnp.max(logits, axis=-1, keepdims=True)
    e = jnp.exp(logits - m)
    denom = jnp.sum(e, axis=-1, keepdims=True)
    o_ref[...] = (e / denom).astype(o_ref.dtype)


def prepare_params(w1, b1, w2, b2, w3, b3, *, use_bf16=True):
    """One-time padding/casting of the weights (hoisted out of forward())."""
    in_dim, hid = w1.shape
    out_dim = w3.shape[1]
    hid_p = _round_up(hid, _LANE)
    mxu_dtype = jnp.bfloat16 if use_bf16 else jnp.float32

    # Zero padding of the hidden axis is mathematically inert: padded h
    # columns are relu(0 + 0) = 0 and the matching padded weight rows are 0.
    w1p = jnp.pad(w1, ((0, 0), (0, hid_p - hid))).astype(mxu_dtype)
    w2p = jnp.pad(w2, ((0, hid_p - hid), (0, hid_p - hid))).astype(mxu_dtype)
    w3p = jnp.pad(w3, ((0, hid_p - hid), (0, 0))).astype(mxu_dtype)
    b1p = jnp.pad(b1.reshape(1, -1), ((0, 0), (0, hid_p - hid))).astype(jnp.float32)
    b2p = jnp.pad(b2.reshape(1, -1), ((0, 0), (0, hid_p - hid))).astype(jnp.float32)
    b3p = b3.reshape(1, -1).astype(jnp.float32)
    return (in_dim, out_dim), (w1p, b1p, w2p, b2p, w3p, b3p)


def discrete_policy_forward(x, prepared, *, block_b=2048):
    (in_dim, out_dim), (w1p, b1p, w2p, b2p, w3p, b3p) = prepared
    B = x.shape[0]
    assert x.shape[1] == in_dim
    hid_p = w1p.shape[1]

    tb, b_p, nb = _batch_tiles(B, block_b)
    xp = x.astype(jnp.float32)
    if b_p != B:
        xp = jnp.pad(xp, ((0, b_p - B), (0, 0)))

    # Weights / biases stay VMEM-resident across the batch grid (constant
    # index_map => DMA'd once per call, never re-fetched per step).
    def resident(shape):
        return pl.BlockSpec(shape, lambda i: (0, 0))

    out = pl.pallas_call(
        _policy_kernel,
        out_shape=jax.ShapeDtypeStruct((b_p, out_dim), jnp.float32),
        grid_spec=pl.GridSpec(
            grid=(nb,),
            in_specs=[
                pl.BlockSpec((tb, in_dim), lambda i: (i, 0)),  # x: tiled over batch
                resident((in_dim, hid_p)),                     # w1
                resident((1, hid_p)),                          # b1
                resident((hid_p, hid_p)),                      # w2
                resident((1, hid_p)),                          # b2
                resident((hid_p, out_dim)),                    # w3
                resident((1, out_dim)),                        # b3
            ],
            out_specs=pl.BlockSpec((tb, out_dim), lambda i: (i, 0)),
        ),
        compiler_params=pltpu.CompilerParams(
            dimension_semantics=("parallel",),        # shard batch across TCs (v7x)
            vmem_limit_bytes=32 * 1024 * 1024,        # safe on v7x's smaller VMEM
        ),
    )(xp, w1p, b1p, w2p, b2p, w3p, b3p)

    return out if b_p == B else out[:B]


def init_params(key, input_dim, output_dim, hidden_dim=64):
    ks = jax.random.split(key, 6)

    # Deterministic synthetic init mimicking PyTorch's default Linear range.
    def lin(kw, kb, fan_in, fan_out):
        bound = 1.0 / jnp.sqrt(fan_in)
        w = jax.random.uniform(kw, (fan_in, fan_out), jnp.float32, -bound, bound)
        b = jax.random.uniform(kb, (1, fan_out), jnp.float32, -bound, bound)
        return w, b

    w1, b1 = lin(ks[0], ks[1], input_dim, hidden_dim)
    w2, b2 = lin(ks[2], ks[3], hidden_dim, hidden_dim)
    w3, b3 = lin(ks[4], ks[5], hidden_dim, output_dim)
    return w1, b1, w2, b2, w3, b3


def _reference(x, params):
    w1, b1, w2, b2, w3, b3 = params
    h = jnp.maximum(x @ w1 + b1, 0.0)
    h = jnp.maximum(h @ w2 + b2, 0.0)
    return jax.nn.softmax(h @ w3 + b3, axis=1)


if __name__ == "__main__":
    key = jax.random.PRNGKey(0)
    k_x, k_x2, k_p = jax.random.split(key, 3)

    B, INPUT_DIM, HIDDEN_DIM, OUTPUT_DIM = 8, 32, 64, 16
    params = init_params(k_p, INPUT_DIM, OUTPUT_DIM, HIDDEN_DIM)
    prepared = prepare_params(*params)   # pad/cast weights once, reuse per call

    # Small single-tile case.
    x = jax.random.normal(k_x, (B, INPUT_DIM), dtype=jnp.float32)
    probs = jax.block_until_ready(discrete_policy_forward(x, prepared))

    # Tolerances: bf16 MXU operands deviate from the f32 reference by up to
    # ~1e-2 (deliberate precision trade-off); the softmax divide is exact, so
    # rows sum to 1 within f32 rounding.
    ref = _reference(x, params)
    assert probs.shape == (B, OUTPUT_DIM)
    assert bool(jnp.all(probs >= 0.0))
    assert jnp.allclose(jnp.sum(probs, axis=1), 1.0, atol=1e-4)
    assert jnp.allclose(probs, ref, atol=1e-2, rtol=0.0)

    # Case exercising row padding + a multi-step (nb >= 2) grid.
    B2 = 40
    x2 = jax.random.normal(k_x2, (B2, INPUT_DIM), dtype=jnp.float32)
    probs2 = jax.block_until_ready(discrete_policy_forward(x2, prepared))
    ref2 = _reference(x2, params)
    assert probs2.shape == (B2, OUTPUT_DIM)
    assert jnp.allclose(jnp.sum(probs2, axis=1), 1.0, atol=1e-4)
    assert jnp.allclose(probs2, ref2, atol=1e-2, rtol=0.0)

    # TODO(synk): sample_action / log_probs / kl_divergence are host-side
    # wrappers around forward() (multinomial sampling / gather / logs) and are
    # not part of this kernel.
    print("KERNEL_OK")
</pallas_src>

<mosaic_0001>
module attributes {stable_mosaic.version = 11 : i64} {
  func.func @_policy_kernel(%arg0: i32, %arg1: memref<16x32xf32, #tpu.memory_space<vmem>>, %arg2: memref<32x128xbf16, #tpu.memory_space<vmem>>, %arg3: memref<1x128xf32, #tpu.memory_space<vmem>>, %arg4: memref<128x128xbf16, #tpu.memory_space<vmem>>, %arg5: memref<1x128xf32, #tpu.memory_space<vmem>>, %arg6: memref<128x16xbf16, #tpu.memory_space<vmem>>, %arg7: memref<1x16xf32, #tpu.memory_space<vmem>>, %arg8: memref<16x16xf32, #tpu.memory_space<vmem>>) attributes {dimension_semantics = [#tpu.dimension_semantics<parallel>], iteration_bounds = array<i64: 1>, scalar_prefetch = 0 : i64, scratch_operands = 0 : i64, tpu.core_type = #tpu.core_type<tc>, window_params = [{transform_indices = @transform_0, window_bounds = array<i64: 16, 32>}, {pipeline_mode = #tpu.pipeline_mode<synchronous>, transform_indices = @transform_1, window_bounds = array<i64: 32, 128>}, {pipeline_mode = #tpu.pipeline_mode<synchronous>, transform_indices = @transform_2, window_bounds = array<i64: 1, 128>}, {pipeline_mode = #tpu.pipeline_mode<synchronous>, transform_indices = @transform_3, window_bounds = array<i64: 128, 128>}, {pipeline_mode = #tpu.pipeline_mode<synchronous>, transform_indices = @transform_4, window_bounds = array<i64: 1, 128>}, {pipeline_mode = #tpu.pipeline_mode<synchronous>, transform_indices = @transform_5, window_bounds = array<i64: 128, 16>}, {pipeline_mode = #tpu.pipeline_mode<synchronous>, transform_indices = @transform_6, window_bounds = array<i64: 1, 16>}, {transform_indices = @transform_7, window_bounds = array<i64: 16, 16>}]} {
    %c0 = arith.constant 0 : index
    %c0_0 = arith.constant 0 : index
    %0 = vector.load %arg1[%c0, %c0_0] : memref<16x32xf32, #tpu.memory_space<vmem>>, vector<16x32xf32>
    %1 = arith.truncf %0 : vector<16x32xf32> to vector<16x32xbf16>
    %c0_1 = arith.constant 0 : index
    %c0_2 = arith.constant 0 : index
    %2 = vector.load %arg2[%c0_1, %c0_2] : memref<32x128xbf16, #tpu.memory_space<vmem>>, vector<32x128xbf16>
    %cst = arith.constant dense<0.000000e+00> : vector<16x128xf32>
    %3 = tpu.matmul %1, %2, %cst {dimension_numbers = #tpu.dot_dimension_numbers<[1], [0], [0], [1], [0, 0, 1, 1], [], []>} : vector<16x32xbf16>, vector<32x128xbf16>, vector<16x128xf32> -> vector<16x128xf32>
    %c0_3 = arith.constant 0 : index
    %c0_4 = arith.constant 0 : index
    %4 = vector.load %arg3[%c0_3, %c0_4] : memref<1x128xf32, #tpu.memory_space<vmem>>, vector<1x128xf32>
    %5 = vector.broadcast %4 : vector<1x128xf32> to vector<16x128xf32>
    %6 = arith.addf %3, %5 : vector<16x128xf32>
    %cst_5 = arith.constant 0.000000e+00 : f32
    %7 = vector.broadcast %cst_5 : f32 to vector<16x128xf32>
    %8 = arith.maximumf %6, %7 : vector<16x128xf32>
    %9 = arith.truncf %8 : vector<16x128xf32> to vector<16x128xbf16>
    %c0_6 = arith.constant 0 : index
    %c0_7 = arith.constant 0 : index
    %10 = vector.load %arg4[%c0_6, %c0_7] : memref<128x128xbf16, #tpu.memory_space<vmem>>, vector<128x128xbf16>
    %cst_8 = arith.constant dense<0.000000e+00> : vector<16x128xf32>
    %11 = tpu.matmul %9, %10, %cst_8 {dimension_numbers = #tpu.dot_dimension_numbers<[1], [0], [0], [1], [0, 0, 1, 1], [], []>} : vector<16x128xbf16>, vector<128x128xbf16>, vector<16x128xf32> -> vector<16x128xf32>
    %c0_9 = arith.constant 0 : index
    %c0_10 = arith.constant 0 : index
    %12 = vector.load %arg5[%c0_9, %c0_10] : memref<1x128xf32, #tpu.memory_space<vmem>>, vector<1x128xf32>
    %13 = vector.broadcast %12 : vector<1x128xf32> to vector<16x128xf32>
    %14 = arith.addf %11, %13 : vector<16x128xf32>
    %cst_11 = arith.constant 0.000000e+00 : f32
    %15 = vector.broadcast %cst_11 : f32 to vector<16x128xf32>
    %16 = arith.maximumf %14, %15 : vector<16x128xf32>
    %17 = arith.truncf %16 : vector<16x128xf32> to vector<16x128xbf16>
    %c0_12 = arith.constant 0 : index
    %c0_13 = arith.constant 0 : index
    %18 = vector.load %arg6[%c0_12, %c0_13] : memref<128x16xbf16, #tpu.memory_space<vmem>>, vector<128x16xbf16>
    %cst_14 = arith.constant dense<0.000000e+00> : vector<16x16xf32>
    %19 = tpu.matmul %17, %18, %cst_14 {dimension_numbers = #tpu.dot_dimension_numbers<[1], [0], [0], [1], [0, 0, 1, 1], [], []>} : vector<16x128xbf16>, vector<128x16xbf16>, vector<16x16xf32> -> vector<16x16xf32>
    %c0_15 = arith.constant 0 : index
    %c0_16 = arith.constant 0 : index
    %20 = vector.load %arg7[%c0_15, %c0_16] : memref<1x16xf32, #tpu.memory_space<vmem>>, vector<1x16xf32>
    %21 = vector.broadcast %20 : vector<1x16xf32> to vector<16x16xf32>
    %22 = arith.addf %19, %21 : vector<16x16xf32>
    %cst_17 = arith.constant dense<0xFF800000> : vector<16xf32>
    %23 = vector.multi_reduction <maximumf>, %22, %cst_17 [1] : vector<16x16xf32> to vector<16xf32>
    %24 = vector.shape_cast %23 : vector<16xf32> to vector<16x1xf32>
    %25 = vector.broadcast %24 : vector<16x1xf32> to vector<16x16xf32>
    %26 = arith.subf %22, %25 : vector<16x16xf32>
    %27 = math.exp %26 : vector<16x16xf32>
    %cst_18 = arith.constant dense<0.000000e+00> : vector<16xf32>
    %28 = vector.multi_reduction <add>, %27, %cst_18 [1] : vector<16x16xf32> to vector<16xf32>
    %29 = vector.shape_cast %28 : vector<16xf32> to vector<16x1xf32>
    %30 = vector.broadcast %29 : vector<16x1xf32> to vector<16x16xf32>
    %31 = arith.divf %27, %30 : vector<16x16xf32>
    %c0_19 = arith.constant 0 : index
    %c0_20 = arith.constant 0 : index
    %32 = vector.load %arg8[%c0_19, %c0_20] : memref<16x16xf32, #tpu.memory_space<vmem>>, vector<16x16xf32>
    tpu.vector_store %arg8[%c0_19, %c0_20], %31 {strides = array<i32>} : memref<16x16xf32, #tpu.memory_space<vmem>>, vector<16x16xf32>,
    return
  }
  func.func @transform_0(%arg0: i32) -> (i32, i32) {
    %c0_i32 = arith.constant 0 : i32
    %c0_i32_0 = arith.constant 0 : i32
    return %arg0, %c0_i32 : i32, i32
  }
  func.func @transform_1(%arg0: i32) -> (i32, i32) {
    %c0_i32 = arith.constant 0 : i32
    %c0_i32_0 = arith.constant 0 : i32
    %c0_i32_1 = arith.constant 0 : i32
    return %c0_i32, %c0_i32_0 : i32, i32
  }
  func.func @transform_2(%arg0: i32) -> (i32, i32) {
    %c0_i32 = arith.constant 0 : i32
    %c0_i32_0 = arith.constant 0 : i32
    %c0_i32_1 = arith.constant 0 : i32
    return %c0_i32, %c0_i32_0 : i32, i32
  }
  func.func @transform_3(%arg0: i32) -> (i32, i32) {
    %c0_i32 = arith.constant 0 : i32
    %c0_i32_0 = arith.constant 0 : i32
    %c0_i32_1 = arith.constant 0 : i32
    return %c0_i32, %c0_i32_0 : i32, i32
  }
  func.func @transform_4(%arg0: i32) -> (i32, i32) {
    %c0_i32 = arith.constant 0 : i32
    %c0_i32_0 = arith.constant 0 : i32
    %c0_i32_1 = arith.constant 0 : i32
    return %c0_i32, %c0_i32_0 : i32, i32
  }
  func.func @transform_5(%arg0: i32) -> (i32, i32) {
    %c0_i32 = arith.constant 0 : i32
    %c0_i32_0 = arith.constant 0 : i32
    %c0_i32_1 = arith.constant 0 : i32
    return %c0_i32, %c0_i32_0 : i32, i32
  }
  func.func @transform_6(%arg0: i32) -> (i32, i32) {
    %c0_i32 = arith.constant 0 : i32
    %c0_i32_0 = arith.constant 0 : i32
    %c0_i32_1 = arith.constant 0 : i32
    return %c0_i32, %c0_i32_0 : i32, i32
  }
  func.func @transform_7(%arg0: i32) -> (i32, i32) {
    %c0_i32 = arith.constant 0 : i32
    %c0_i32_0 = arith.constant 0 : i32
    return %arg0, %c0_i32 : i32, i32
  }
}

</mosaic_0001>

<llo_original>
// kernel: tpu_custom_call.1
$region0: #{tpu_custom_call.1}
  #allocation0 [shape = 'u32[]', space=smem, size = 0x4, offset = 0x4, fixed_abs, tag = 'smem constant byte address 0x4 - core index']
  #allocation1 [shape = 'u32[72,128]{1,0:T(1,128)}', space=vmem, size = 0x9000, scoped, tag = 'internal scratch']
  %s0 = inlined_call_operand.hbm [shape: f32[16,32], index: 0, kind: input, shape index: {}]
  %s1 = inlined_call_operand.hbm [shape: bf16[32,128], index: 1, kind: input, shape index: {}]
  %s2 = inlined_call_operand.vmem [shape: f32[1,128], index: 2, kind: input, shape index: {}]
  %s3 = inlined_call_operand.vmem [shape: bf16[128,128], index: 3, kind: input, shape index: {}]
  %s4 = inlined_call_operand.vmem [shape: f32[1,128], index: 4, kind: input, shape index: {}]
  %s5 = inlined_call_operand.vmem [shape: bf16[128,16], index: 5, kind: input, shape index: {}]
  %s6 = inlined_call_operand.vmem [shape: f32[1,16], index: 6, kind: input, shape index: {}]
  %s7 = inlined_call_operand.hbm [shape: f32[16,16], index: 7, kind: output, shape index: {}]
  %s8 = sld [smem:[#allocation0]]
  $region46: #{tpu_custom_call.1} parent=0
    _
  %s10 = ssub.s32 1, %s8
  %s11 = scalar_select 0, %s10, %s8
  $region1: #{tpu_custom_call.1} parent=0
    #allocation2 [shape = 'u8[8192]{0}', space=vmem, size = 0x2000, scoped, tag = 'input window, operand 0, single buffered']
    #allocation3 [shape = 's32[1]{0}', space=sflag, size = 0x4, scoped, tag = 'scoped memory for tpu_custom_call.1']
    #allocation4 [shape = 's32[1]{0}', space=sflag, size = 0x4, scoped, tag = 'scoped memory for tpu_custom_call.1']
    #allocation5 [shape = 'u8[8192]{0}', space=vmem, size = 0x2000, scoped, tag = 'input window, operand 1, single buffered']
    #allocation6 [shape = 's32[1]{0}', space=sflag, size = 0x4, scoped, tag = 'scoped memory for tpu_custom_call.1']
    #allocation7 [shape = 'u8[8192]{0}', space=vmem, size = 0x2000, scoped, tag = 'output window, operand 0, single buffered']
    %12 = vsyncpa [#allocation3], 0
    %13 = vsyncpa [#allocation6], 0
    %14 = vsyncpa [#allocation4], 0
    // Predicated region
    $region2: #{tpu_custom_call.1} parent=1 // pred_check
      _
    $region3: #{tpu_custom_call.1} parent=1 // pred_check_branch
      %16 = sbr.rel (0) target = $region5
    $region4: #{tpu_custom_call.1} parent=1 // pred_region
      %18 = vsyncadd [#allocation3], 0
      %s19 = sshll.u32 %s0, 4
      %s20 = int_to_ptr.hbm [resolvable:$true] %s19
      %s21 = sshll.u32 [#allocation2], 4
      %s22 = int_to_ptr.vmem [resolvable:$true] %s21
      %27 = dma.hbm_to_vmem [thread:$0]  %s20, 256, %s22, [#allocation3], 128, 128, 8
    $region5: #{tpu_custom_call.1} parent=1 // pred_fallthru
      _
    // Predicated region
    $region6: #{tpu_custom_call.1} parent=1 // pred_check
      _
    $region7: #{tpu_custom_call.1} parent=1 // pred_check_branch
      %29 = sbr.rel (0) target = $region9
    $region8: #{tpu_custom_call.1} parent=1 // pred_region
      %31 = vsyncadd [#allocation6], 0
      %s32 = sshll.u32 %s1, 4
      %s33 = int_to_ptr.hbm [resolvable:$true] %s32
      %s34 = sshll.u32 [#allocation5], 4
      %s35 = int_to_ptr.vmem [resolvable:$true] %s34
      %40 = dma.hbm_to_vmem [thread:$0]  %s33, 256, %s35, [#allocation6], 64, 64, 4
    $region9: #{tpu_custom_call.1} parent=1 // pred_fallthru
      _
    // Predicated region
    $region10: #{tpu_custom_call.1} parent=1 // pred_check
      _
    $region11: #{tpu_custom_call.1} parent=1 // pred_check_branch
      %42 = sbr.rel (0) target = $region13
    $region12: #{tpu_custom_call.1} parent=1 // pred_region
      _
    $region13: #{tpu_custom_call.1} parent=1 // pred_fallthru
      _
    // Predicated region
    $region14: #{tpu_custom_call.1} parent=1 // pred_check
      _
    $region15: #{tpu_custom_call.1} parent=1 // pred_check_branch
      %44 = sbr.rel (0) target = $region17
    $region16: #{tpu_custom_call.1} parent=1 // pred_region
      _
    $region17: #{tpu_custom_call.1} parent=1 // pred_fallthru
      _
    // Predicated region
    $region18: #{tpu_custom_call.1} parent=1 // pred_check
      _
    $region19: #{tpu_custom_call.1} parent=1 // pred_check_branch
      %46 = sbr.rel (0) target = $region21
    $region20: #{tpu_custom_call.1} parent=1 // pred_region
      _
    $region21: #{tpu_custom_call.1} parent=1 // pred_fallthru
      _
    // Predicated region
    $region22: #{tpu_custom_call.1} parent=1 // pred_check
      _
    $region23: #{tpu_custom_call.1} parent=1 // pred_check_branch
      %48 = sbr.rel (0) target = $region25
    $region24: #{tpu_custom_call.1} parent=1 // pred_region
      _
    $region25: #{tpu_custom_call.1} parent=1 // pred_fallthru
      _
    // Predicated region
    $region26: #{tpu_custom_call.1} parent=1 // pred_check
      _
    $region27: #{tpu_custom_call.1} parent=1 // pred_check_branch
      %50 = sbr.rel (0) target = $region29
    $region28: #{tpu_custom_call.1} parent=1 // pred_region
      _
    $region29: #{tpu_custom_call.1} parent=1 // pred_fallthru
      _
    // Predicated region
    $region30: #{tpu_custom_call.1} parent=1 // pred_check
      _
    $region31: #{tpu_custom_call.1} parent=1 // pred_check_branch
      %52 = sbr.rel (0) target = $region33
    $region32: #{tpu_custom_call.1} parent=1 // pred_region
      %54 = dma.done [#allocation3], 256
    $region33: #{tpu_custom_call.1} parent=1 // pred_fallthru
      _
    // Predicated region
    $region34: #{tpu_custom_call.1} parent=1 // pred_check
      _
    $region35: #{tpu_custom_call.1} parent=1 // pred_check_branch
      %56 = sbr.rel (0) target = $region37
    $region36: #{tpu_custom_call.1} parent=1 // pred_region
      %58 = dma.done [#allocation6], 256
    $region37: #{tpu_custom_call.1} parent=1 // pred_fallthru
      _
    %v60 = vld [vmem:[#allocation2] sm:$0xff]
    %v61 = vld [vmem:[#allocation2 + $0x8] sm:$0xff]
    %v62 = vpack.c.bf16 %v61, %v60
    %v63 = vld [vmem:[#allocation5] sm:$0xf]
    %v64 = vld [vmem:[#allocation5 + $0x4] sm:$0xf]
    %v65 = vld [vmem:[#allocation5 + $0x8] sm:$0xf]
    %v66 = vld [vmem:[#allocation5 + $0xc] sm:$0xf]
    %v67 = vld [vmem:[%s2] sm:$0x1]
    %v69 = vperm.slane %v67, 0
    %v75 = vunpack.c.l.b16 %v63
    %v76 = vunpack.c.l.b16 %v64
    %v77 = vunpack.c.l.b16 %v65
    %v78 = vunpack.c.l.b16 %v66
    %v79 = vpack.c.b16 %v76, %v75
    %v80 = vpack.c.b16 %v78, %v77
    %vm83 = vcmask 261120
    %v85 = vsel %vm83, %v62, 0
    %87 = vmatpush.bf16.msra.mxu0 0
    %88 = vmatpush.bf16.msra.mxu0 0
    %89 = vmatpush.bf16.msra.mxu0 0
    %90 = vmatpush.bf16.msra.mxu0 0
    %91 = vmatpush.bf16.msra.mxu0 0
    %92 = vmatpush.bf16.msra.mxu0 0
    %93 = vmatpush.bf16.msra.mxu0 %v80
    %94 = vmatpush.bf16.msra.mxu0 %v79
    %95 = vmatmul.bf16.gmra.mxu0 %v85
    %v96 = vpop.f32.mrf.mxu0
    %v97 = vadd.f32 %v69, %v96
    %v98 = vpop.f32.mrf.mxu0
    %v99 = vadd.f32 %v69, %v98
    %100 = vdwg.mxu0
    %v101 = vmax.f32 %v97, 0.0
    %v102 = vmax.f32 %v99, 0.0
    %v103 = vpack.c.bf16 %v102, %v101
    %v104 = vld [vmem:[%s3] sm:$0xf]
    %v105 = vld [vmem:[%s3 + $0x4] sm:$0xf]
    %v106 = vld [vmem:[%s3 + $0x8] sm:$0xf]
    %v107 = vld [vmem:[%s3 + $0xc] sm:$0xf]
    %v108 = vld [vmem:[%s3 + $0x10] sm:$0xf]
    %v109 = vld [vmem:[%s3 + $0x14] sm:$0xf]
    %v110 = vld [vmem:[%s3 + $0x18] sm:$0xf]
    %v111 = vld [vmem:[%s3 + $0x1c] sm:$0xf]
    %v112 = vld [vmem:[%s3 + $0x20] sm:$0xf]
    %v113 = vld [vmem:[%s3 + $0x24] sm:$0xf]
    %v114 = vld [vmem:[%s3 + $0x28] sm:$0xf]
    %v115 = vld [vmem:[%s3 + $0x2c] sm:$0xf]
    %v116 = vld [vmem:[%s3 + $0x30] sm:$0xf]
    %v117 = vld [vmem:[%s3 + $0x34] sm:$0xf]
    %v118 = vld [vmem:[%s3 + $0x38] sm:$0xf]
    %v119 = vld [vmem:[%s3 + $0x3c] sm:$0xf]
    %v120 = vld [vmem:[%s4] sm:$0x1]
    %v122 = vperm.slane %v120, 0
    %v140 = vunpack.c.l.b16 %v104
    %v141 = vunpack.c.l.b16 %v105
    %v142 = vunpack.c.l.b16 %v106
    %v143 = vunpack.c.l.b16 %v107
    %v144 = vunpack.c.l.b16 %v108
    %v145 = vunpack.c.l.b16 %v109
    %v146 = vunpack.c.l.b16 %v110
    %v147 = vunpack.c.l.b16 %v111
    %v148 = vunpack.c.l.b16 %v112
    %v149 = vunpack.c.l.b16 %v113
    %v150 = vunpack.c.l.b16 %v114
    %v151 = vunpack.c.l.b16 %v115
    %v152 = vunpack.c.l.b16 %v116
    %v153 = vunpack.c.l.b16 %v117
    %v154 = vunpack.c.l.b16 %v118
    %v155 = vunpack.c.l.b16 %v119
    %v156 = vpack.c.b16 %v141, %v140
    %v157 = vpack.c.b16 %v143, %v142
    %v158 = vpack.c.b16 %v145, %v144
    %v159 = vpack.c.b16 %v147, %v146
    %v160 = vpack.c.b16 %v149, %v148
    %v161 = vpack.c.b16 %v151, %v150
    %v162 = vpack.c.b16 %v153, %v152
    %v163 = vpack.c.b16 %v155, %v154
    %172 = vmatpush.bf16.msra.mxu0 %v163
    %173 = vmatpush.bf16.msra.mxu0 %v162
    %174 = vmatpush.bf16.msra.mxu0 %v161
    %175 = vmatpush.bf16.msra.mxu0 %v160
    %176 = vmatpush.bf16.msra.mxu0 %v159
    %177 = vmatpush.bf16.msra.mxu0 %v158
    %178 = vmatpush.bf16.msra.mxu0 %v157
    %179 = vmatpush.bf16.msra.mxu0 %v156
    %180 = vmatmul.bf16.gmra.mxu0 %v103
    %v181 = vpop.f32.mrf.mxu0
    %v182 = vadd.f32 %v122, %v181
    %v183 = vpop.f32.mrf.mxu0
    %v184 = vadd.f32 %v122, %v183
    %185 = vdwg.mxu0
    %v186 = vmax.f32 %v182, 0.0
    %v187 = vmax.f32 %v184, 0.0
    %v188 = vpack.c.bf16 %v187, %v186
    %v189 = vld [vmem:[%s5] sm:$0xf]
    %v190 = vld [vmem:[%s5 + $0x4] sm:$0xf]
    %v191 = vld [vmem:[%s5 + $0x8] sm:$0xf]
    %v192 = vld [vmem:[%s5 + $0xc] sm:$0xf]
    %v193 = vld [vmem:[%s5 + $0x10] sm:$0xf]
    %v194 = vld [vmem:[%s5 + $0x14] sm:$0xf]
    %v195 = vld [vmem:[%s5 + $0x18] sm:$0xf]
    %v196 = vld [vmem:[%s5 + $0x1c] sm:$0xf]
    %v197 = vld [vmem:[%s5 + $0x20] sm:$0xf]
    %v198 = vld [vmem:[%s5 + $0x24] sm:$0xf]
    %v199 = vld [vmem:[%s5 + $0x28] sm:$0xf]
    %v200 = vld [vmem:[%s5 + $0x2c] sm:$0xf]
    %v201 = vld [vmem:[%s5 + $0x30] sm:$0xf]
    %v202 = vld [vmem:[%s5 + $0x34] sm:$0xf]
    %v203 = vld [vmem:[%s5 + $0x38] sm:$0xf]
    %v204 = vld [vmem:[%s5 + $0x3c] sm:$0xf]
    %v205 = vld [vmem:[%s6] sm:$0x1]
    %v207 = vperm.slane %v205, 0
    %v225 = vunpack.c.l.b16 %v189
    %v226 = vunpack.c.l.b16 %v190
    %v227 = vunpack.c.l.b16 %v191
    %v228 = vunpack.c.l.b16 %v192
    %v229 = vunpack.c.l.b16 %v193
    %v230 = vunpack.c.l.b16 %v194
    %v231 = vunpack.c.l.b16 %v195
    %v232 = vunpack.c.l.b16 %v196
    %v233 = vunpack.c.l.b16 %v197
    %v234 = vunpack.c.l.b16 %v198
    %v235 = vunpack.c.l.b16 %v199
    %v236 = vunpack.c.l.b16 %v200
    %v237 = vunpack.c.l.b16 %v201
    %v238 = vunpack.c.l.b16 %v202
    %v239 = vunpack.c.l.b16 %v203
    %v240 = vunpack.c.l.b16 %v204
    %v241 = vpack.c.b16 %v226, %v225
    %v242 = vpack.c.b16 %v228, %v227
    %v243 = vpack.c.b16 %v230, %v229
    %v244 = vpack.c.b16 %v232, %v231
    %v245 = vpack.c.b16 %v234, %v233
    %v246 = vpack.c.b16 %v236, %v235
    %v247 = vpack.c.b16 %v238, %v237
    %v248 = vpack.c.b16 %v240, %v239
    %257 = vmatpush.bf16.msra.mxu0 %v248
    %258 = vmatpush.bf16.msra.mxu0 %v247
    %259 = vmatpush.bf16.msra.mxu0 %v246
    %260 = vmatpush.bf16.msra.mxu0 %v245
    %261 = vmatpush.bf16.msra.mxu0 %v244
    %262 = vmatpush.bf16.msra.mxu0 %v243
    %263 = vmatpush.bf16.msra.mxu0 %v242
    %264 = vmatpush.bf16.msra.mxu0 %v241
    %265 = vmatmul.bf16.gmra.mxu0 %v188
    %v266 = vpop.f32.mrf.mxu0
    %v267 = vadd.f32 %v207, %v266
    %v268 = vpop.f32.mrf.mxu0
    %v269 = vadd.f32 %v207, %v268
    %270 = vdwg.mxu0
    %vm271 = vcmask 130048
    %v272 = vsel %vm271, %v267, -inf
    %273 = vmax.xlane.f32.xlu0 %v272
    %v274 = vpop.xlane.xlu0 %273
    %v275 = vsel %vm271, %v269, -inf
    %276 = vmax.xlane.f32.xlu0 %v275
    %v277 = vpop.xlane.xlu0 %276
    %v278 = vsub.f32 %v267, %v274
    %v279 = vsub.f32 %v269, %v277
    %v280 = vmul.f32 %v278, 1.442695
    %v281 = vpow.pop %v280
    %v282 = vmul.f32 %v279, 1.442695
    %v283 = vpow.pop %v282
    %v284 = vsel %vm271, %v281, 0.0
    %285 = vadd.xlane.f32.xlu0 %v284
    %v286 = vpop.xlane.xlu0 %285
    %v287 = vsel %vm271, %v283, 0.0
    %288 = vadd.xlane.f32.xlu0 %v287
    %v289 = vpop.xlane.xlu0 %288
    %v290 = vrcp.pop %v286
    %v291 = vmul.f32 %v286, %v290
    %v292 = vsub.f32 1.0, %v291
    %v293 = vmul.f32 %v290, %v292
    %v294 = vadd.f32 %v290, %v293
    %vm295 = vweird.f32 %v286
    %vm296 = vweird.f32 %v290
    %vm297 = vmor %vm295, %vm296
    %v298 = vsel %vm297, %v290, %v294
    %v299 = vand.u32 2147483647, %v286
    %vm300 = vcmp.eq.f32.partialorder %v299, 8.507059e+37
    %v301 = vand.u32 %v286, 2147483648
    %v302 = vor.u32 1.1754944e-38, %v301
    %v303 = vsel %vm300, %v302, %v298
    %v304 = vmul.f32 %v281, %v303
    %v305 = vrcp.pop %v289
    %v306 = vmul.f32 %v289, %v305
    %v307 = vsub.f32 1.0, %v306
    %v308 = vmul.f32 %v305, %v307
    %v309 = vadd.f32 %v305, %v308
    %vm310 = vweird.f32 %v289
    %vm311 = vweird.f32 %v305
    %vm312 = vmor %vm310, %vm311
    %v313 = vsel %vm312, %v305, %v309
    %v314 = vand.u32 2147483647, %v289
    %vm315 = vcmp.eq.f32.partialorder %v314, 8.507059e+37
    %v316 = vand.u32 %v289, 2147483648
    %v317 = vor.u32 1.1754944e-38, %v316
    %v318 = vsel %vm315, %v317, %v313
    %v319 = vmul.f32 %v283, %v318
    %320 = vst.msk [vmem:[#allocation7] sm:$0xff] %vm271, %v304
    %321 = vst.msk [vmem:[#allocation7 + $0x8] sm:$0xff] %vm271, %v319
    // Predicated region
    $region38: #{tpu_custom_call.1} parent=1 // pred_check
      _
    $region39: #{tpu_custom_call.1} parent=1 // pred_check_branch
      %323 = sbr.rel (0) target = $region41
    $region40: #{tpu_custom_call.1} parent=1 // pred_region
      %325 = vsyncadd [#allocation4], 0
      %s326 = sshll.u32 [#allocation7], 4
      %s327 = int_to_ptr.vmem [resolvable:$true] %s326
      %s328 = sshll.u32 %s7, 4
      %s329 = int_to_ptr.hbm [resolvable:$true] %s328
      %334 = dma.vmem_to_hbm [thread:$0]  %s327, 256, %s329, [#allocation4], 128, 128, 8
    $region41: #{tpu_custom_call.1} parent=1 // pred_fallthru
      _
    // Predicated region
    $region42: #{tpu_custom_call.1} parent=1 // pred_check
      _
    $region43: #{tpu_custom_call.1} parent=1 // pred_check_branch
      %336 = sbr.rel (0) target = $region45
    $region44: #{tpu_custom_call.1} parent=1 // pred_region
      %338 = dma.done [#allocation4], 256
    $region45: #{tpu_custom_call.1} parent=1 // pred_fallthru
      _
    %339 = vsyncpa [#allocation3], 1
    %340 = vsyncpa [#allocation6], 1
    %341 = vsyncpa [#allocation4], 1

</llo_original>
